<compile_context>
chip_gen: v6e
topology: v6e:2x2x1
jax: 0.10.0
libtpu: 0.0.40
codegen_flags: <defaults>
</compile_context>

<pallas_src>
import functools
import math

import jax
import jax.numpy as jnp
from jax.experimental import pallas as pl
from jax.experimental.pallas import tpu as pltpu


def _sdpa_kernel(q_ref, k_ref, v_ref, out_ref, score_ref, *, scale):
    # Blocks: q (Gb, tq, D), k/v (Gb, L, D), out (Gb, tq, D), score (Gb, tq, L).
    q = q_ref[...]
    k = k_ref[...]
    v = v_ref[...]

    # Fold 1/sqrt(D) into q (cheaper than scaling the (tq, L) score).
    qs = q * jnp.asarray(scale, dtype=q.dtype)

    # s = q @ k^T without materializing a transpose: contract the last axes,
    # batch over the folded-head axis.  Native-dtype MXU inputs, f32 accumulate.
    s = jax.lax.dot_general(
        qs, k,
        dimension_numbers=(((2,), (2,)), ((0,), (0,))),
        preferred_element_type=jnp.float32,
    )  # (Gb, tq, L) f32

    # Numerically stable softmax; only this part is f32 VPU/EUP math.
    s_max = jnp.max(s, axis=-1, keepdims=True)
    p = jnp.exp(s - s_max)
    denom = jnp.sum(p, axis=-1, keepdims=True)

    # Context from the *unnormalized* probabilities so the second MXU matmul can
    # issue without waiting on the (tq, L) normalize; then scale the (tq, D)
    # result by 1/denom from the EUP (approx reciprocal, otherwise-idle slot).
    ctx = jax.lax.dot_general(
        p.astype(v.dtype), v,
        dimension_numbers=(((2,), (1,)), ((0,), (0,))),
        preferred_element_type=jnp.float32,
    )  # (Gb, tq, D) f32
    out_ref[...] = (ctx * pl.reciprocal(denom, approx=True)).astype(out_ref.dtype)

    # Exact normalize only for the score output (matches nn.Softmax tightly).
    score_ref[...] = (p * pl.reciprocal(denom, approx=False)).astype(score_ref.dtype)


def _pick_q_tile(length):
    """Tile the query axis for long sequences; full length otherwise."""
    if length <= 1024:
        return length
    for tq in (512, 256, 128):
        if length % tq == 0:
            return tq
    return length  # ragged lengths: fall back to one full-L tile


def _pick_head_group(num_heads, length, d_tensor, itemsize):
    """Fold several (batch*head) slabs into one grid step when per-head work is
    tiny, so each step does >= 1 vreg of real work and per-step overhead
    amortizes.  Keep the folded per-step working set small enough to
    double-buffer comfortably."""
    budget = 2 * 1024 * 1024  # ~2 MiB of q/k/v/score per step
    best = 1
    for g in range(1, num_heads + 1):
        if num_heads % g:
            continue
        per_step = g * (3 * length * d_tensor + length * length) * itemsize
        if per_step <= budget:
            best = g
    return best


def scale_dot_product_attention(q, k, v):
    """q, k, v: (B, H, L, D) arrays. Returns (context (B,H,L,D), score (B,H,L,L))."""
    B, H, L, D = q.shape
    assert k.shape == (B, H, L, D) and v.shape == (B, H, L, D)
    # TODO(synk): mask path (masked_fill) not implemented; module default mask=None.

    BH = B * H
    qf = q.reshape(BH, L, D)   # free reshape, no transpose
    kf = k.reshape(BH, L, D)
    vf = v.reshape(BH, L, D)

    itemsize = jnp.dtype(q.dtype).itemsize
    tq = _pick_q_tile(L)
    gb = _pick_head_group(BH, L, D, itemsize)
    if tq < L:
        gb = 1  # query tiling only kicks in when a single head is already big

    grid = (BH // gb, L // tq)

    q_spec = pl.BlockSpec((gb, tq, D), lambda g, i: (g, i, 0))
    kv_spec = pl.BlockSpec((gb, L, D), lambda g, i: (g, 0, 0))
    out_spec = pl.BlockSpec((gb, tq, D), lambda g, i: (g, i, 0))
    # Score block is lane-dense (last dim = full L); score dtype = input dtype,
    # halving the dominant B*H*L^2 HBM writeback vs hard-coded f32.
    score_spec = pl.BlockSpec((gb, tq, L), lambda g, i: (g, i, 0))
    score_dtype = q.dtype

    out_shapes = (
        jax.ShapeDtypeStruct((BH, L, D), q.dtype),
        jax.ShapeDtypeStruct((BH, L, L), score_dtype),
    )

    # Scoped-VMEM limit sized from the chosen tiles: double-buffered in/out
    # blocks plus in-kernel f32 temporaries, clamped to [16 MiB, 48 MiB] so it
    # is valid on v5e/v6e (128 MiB physical) and v7x (64 MiB physical).
    per_step = gb * (2 * tq * D + 2 * L * D) * itemsize \
        + gb * tq * L * jnp.dtype(score_dtype).itemsize
    f32_tmp = gb * tq * (2 * L + D) * 4
    vmem_limit = int(min(max(2 * per_step + f32_tmp + (4 << 20), 16 << 20), 48 << 20))

    kernel = functools.partial(_sdpa_kernel, scale=1.0 / math.sqrt(D))

    ctx, score = pl.pallas_call(
        kernel,
        out_shape=out_shapes,
        grid_spec=pltpu.PrefetchScalarGridSpec(
            num_scalar_prefetch=0,
            grid=grid,
            in_specs=[q_spec, kv_spec, kv_spec],
            out_specs=[out_spec, score_spec],
        ),
        compiler_params=pltpu.CompilerParams(
            dimension_semantics=("parallel", "parallel"),
            vmem_limit_bytes=vmem_limit,
        ),
    )(qf, kf, vf)

    return ctx.reshape(B, H, L, D), score.reshape(B, H, L, L)


if __name__ == "__main__":
    # Small, deterministic inputs consistent with the module's (B, H, L, D) forward.
    B, H, L, D = 2, 4, 8, 32
    key = jax.random.PRNGKey(0)
    kq, kk, kv = jax.random.split(key, 3)
    q = jax.random.normal(kq, (B, H, L, D), dtype=jnp.float32)
    k = jax.random.normal(kk, (B, H, L, D), dtype=jnp.float32)
    v = jax.random.normal(kv, (B, H, L, D), dtype=jnp.float32)

    ctx, score = scale_dot_product_attention(q, k, v)
    jax.block_until_ready((ctx, score))

    # Correctness vs a pure-JAX reference.  The score path uses the exact
    # reciprocal (tight tolerance); the context is scaled with the EUP
    # approximate reciprocal, so its tolerance is slightly looser.
    s_ref = jnp.einsum("bhld,bhmd->bhlm", q, k) / math.sqrt(D)
    p_ref = jax.nn.softmax(s_ref, axis=-1)
    ctx_ref = jnp.einsum("bhlm,bhmd->bhld", p_ref, v)
    assert score.dtype == q.dtype and ctx.dtype == q.dtype
    assert jnp.allclose(score, p_ref, atol=1e-5, rtol=1e-5)
    assert jnp.allclose(ctx, ctx_ref, atol=1e-2, rtol=1e-2)

    print("KERNEL_OK")
</pallas_src>

<mosaic_0001>
module attributes {stable_mosaic.version = 11 : i64} {
  func.func @_sdpa_kernel(%arg0: i32, %arg1: i32, %arg2: memref<8x8x32xf32, #tpu.memory_space<vmem>>, %arg3: memref<8x8x32xf32, #tpu.memory_space<vmem>>, %arg4: memref<8x8x32xf32, #tpu.memory_space<vmem>>, %arg5: memref<8x8x32xf32, #tpu.memory_space<vmem>>, %arg6: memref<8x8x8xf32, #tpu.memory_space<vmem>>) attributes {dimension_semantics = [#tpu.dimension_semantics<parallel>, #tpu.dimension_semantics<parallel>], iteration_bounds = array<i64: 1, 1>, scalar_prefetch = 0 : i64, scratch_operands = 0 : i64, tpu.core_type = #tpu.core_type<tc>, window_params = [{transform_indices = @transform_0, window_bounds = array<i64: 8, 8, 32>}, {transform_indices = @transform_1, window_bounds = array<i64: 8, 8, 32>}, {transform_indices = @transform_2, window_bounds = array<i64: 8, 8, 32>}, {transform_indices = @transform_3, window_bounds = array<i64: 8, 8, 32>}, {transform_indices = @transform_4, window_bounds = array<i64: 8, 8, 8>}]} {
    %c0 = arith.constant 0 : index
    %c0_0 = arith.constant 0 : index
    %c0_1 = arith.constant 0 : index
    %0 = vector.load %arg2[%c0, %c0_0, %c0_1] : memref<8x8x32xf32, #tpu.memory_space<vmem>>, vector<8x8x32xf32>
    %c0_2 = arith.constant 0 : index
    %c0_3 = arith.constant 0 : index
    %c0_4 = arith.constant 0 : index
    %1 = vector.load %arg3[%c0_2, %c0_3, %c0_4] : memref<8x8x32xf32, #tpu.memory_space<vmem>>, vector<8x8x32xf32>
    %c0_5 = arith.constant 0 : index
    %c0_6 = arith.constant 0 : index
    %c0_7 = arith.constant 0 : index
    %2 = vector.load %arg4[%c0_5, %c0_6, %c0_7] : memref<8x8x32xf32, #tpu.memory_space<vmem>>, vector<8x8x32xf32>
    %cst = arith.constant 0.176776692 : f32
    %3 = vector.broadcast %cst : f32 to vector<8x8x32xf32>
    %4 = arith.mulf %0, %3 : vector<8x8x32xf32>
    %cst_8 = arith.constant dense<0.000000e+00> : vector<8x8x8xf32>
    %5 = tpu.matmul %4, %1, %cst_8 {dimension_numbers = #tpu.dot_dimension_numbers<[2], [2], [1], [1], [0, 0, 0, 1, 1, 1], [0], [0]>} : vector<8x8x32xf32>, vector<8x8x32xf32>, vector<8x8x8xf32> -> vector<8x8x8xf32>
    %cst_9 = arith.constant dense<0xFF800000> : vector<8x8xf32>
    %6 = vector.multi_reduction <maximumf>, %5, %cst_9 [2] : vector<8x8x8xf32> to vector<8x8xf32>
    %7 = vector.shape_cast %6 : vector<8x8xf32> to vector<8x8x1xf32>
    %8 = vector.broadcast %7 : vector<8x8x1xf32> to vector<8x8x8xf32>
    %9 = arith.subf %5, %8 : vector<8x8x8xf32>
    %10 = math.exp %9 : vector<8x8x8xf32>
    %cst_10 = arith.constant dense<0.000000e+00> : vector<8x8xf32>
    %11 = vector.multi_reduction <add>, %10, %cst_10 [2] : vector<8x8x8xf32> to vector<8x8xf32>
    %12 = vector.shape_cast %11 : vector<8x8xf32> to vector<8x8x1xf32>
    %cst_11 = arith.constant dense<0.000000e+00> : vector<8x8x32xf32>
    %13 = tpu.matmul %10, %2, %cst_11 {dimension_numbers = #tpu.dot_dimension_numbers<[2], [1], [1], [2], [0, 0, 0, 1, 1, 2], [0], [0]>} : vector<8x8x8xf32>, vector<8x8x32xf32>, vector<8x8x32xf32> -> vector<8x8x32xf32>
    %14 = tpu.reciprocal %12 {approx = true} : vector<8x8x1xf32> -> vector<8x8x1xf32>
    %15 = vector.broadcast %14 : vector<8x8x1xf32> to vector<8x8x32xf32>
    %16 = arith.mulf %13, %15 : vector<8x8x32xf32>
    %c0_12 = arith.constant 0 : index
    %c0_13 = arith.constant 0 : index
    %c0_14 = arith.constant 0 : index
    %17 = vector.load %arg5[%c0_12, %c0_13, %c0_14] : memref<8x8x32xf32, #tpu.memory_space<vmem>>, vector<8x8x32xf32>
    tpu.vector_store %arg5[%c0_12, %c0_13, %c0_14], %16 {strides = array<i32>} : memref<8x8x32xf32, #tpu.memory_space<vmem>>, vector<8x8x32xf32>,
    %18 = tpu.reciprocal %12 : vector<8x8x1xf32> -> vector<8x8x1xf32>
    %19 = vector.broadcast %18 : vector<8x8x1xf32> to vector<8x8x8xf32>
    %20 = arith.mulf %10, %19 : vector<8x8x8xf32>
    %c0_15 = arith.constant 0 : index
    %c0_16 = arith.constant 0 : index
    %c0_17 = arith.constant 0 : index
    %21 = vector.load %arg6[%c0_15, %c0_16, %c0_17] : memref<8x8x8xf32, #tpu.memory_space<vmem>>, vector<8x8x8xf32>
    tpu.vector_store %arg6[%c0_15, %c0_16, %c0_17], %20 {strides = array<i32>} : memref<8x8x8xf32, #tpu.memory_space<vmem>>, vector<8x8x8xf32>,
    return
  }
  func.func @transform_0(%arg0: i32, %arg1: i32) -> (i32, i32, i32) {
    %c0_i32 = arith.constant 0 : i32
    %c0_i32_0 = arith.constant 0 : i32
    return %arg0, %arg1, %c0_i32 : i32, i32, i32
  }
  func.func @transform_1(%arg0: i32, %arg1: i32) -> (i32, i32, i32) {
    %c0_i32 = arith.constant 0 : i32
    %c0_i32_0 = arith.constant 0 : i32
    %c0_i32_1 = arith.constant 0 : i32
    return %arg0, %c0_i32, %c0_i32_0 : i32, i32, i32
  }
  func.func @transform_2(%arg0: i32, %arg1: i32) -> (i32, i32, i32) {
    %c0_i32 = arith.constant 0 : i32
    %c0_i32_0 = arith.constant 0 : i32
    %c0_i32_1 = arith.constant 0 : i32
    return %arg0, %c0_i32, %c0_i32_0 : i32, i32, i32
  }
  func.func @transform_3(%arg0: i32, %arg1: i32) -> (i32, i32, i32) {
    %c0_i32 = arith.constant 0 : i32
    %c0_i32_0 = arith.constant 0 : i32
    return %arg0, %arg1, %c0_i32 : i32, i32, i32
  }
  func.func @transform_4(%arg0: i32, %arg1: i32) -> (i32, i32, i32) {
    %c0_i32 = arith.constant 0 : i32
    %c0_i32_0 = arith.constant 0 : i32
    return %arg0, %arg1, %c0_i32 : i32, i32, i32
  }
}

</mosaic_0001>

<llo_original>
// kernel: tpu_custom_call.1
$region0: #{tpu_custom_call.1}
  #allocation0 [shape = 'u32[]', space=smem, size = 0x4, offset = 0x4, fixed_abs, tag = 'smem constant byte address 0x4 - core index']
  #allocation1 [shape = 'u32[144,128]{1,0:T(1,128)}', space=vmem, size = 0x12000, scoped, tag = 'internal scratch']
  %s0 = inlined_call_operand.hbm [shape: f32[8,8,32], index: 0, kind: input, shape index: {}]
  %s1 = inlined_call_operand.hbm [shape: f32[8,8,32], index: 1, kind: input, shape index: {}]
  %s2 = inlined_call_operand.hbm [shape: f32[8,8,32], index: 2, kind: input, shape index: {}]
  %s3 = inlined_call_operand.hbm [shape: f32[8,8,32], index: 3, kind: output, shape index: {0}]
  %s4 = inlined_call_operand.hbm [shape: f32[8,8,8], index: 4, kind: output, shape index: {1}]
  %5 = xla_tuple %s3, %s4
  %s6 = sld [smem:[#allocation0]]
  $region42: #{tpu_custom_call.1} parent=0
    _
  %s8 = ssub.s32 1, %s6
  %s9 = scalar_select 0, %s8, %s6
  $region1: #{tpu_custom_call.1} parent=0
    #allocation2 [shape = 'u8[32768]{0}', space=vmem, size = 0x8000, scoped, tag = 'input window, operand 0, single buffered']
    #allocation3 [shape = 's32[1]{0}', space=sflag, size = 0x4, scoped, tag = 'scoped memory for tpu_custom_call.1']
    #allocation4 [shape = 's32[1]{0}', space=sflag, size = 0x4, scoped, tag = 'scoped memory for tpu_custom_call.1']
    #allocation5 [shape = 'u8[32768]{0}', space=vmem, size = 0x8000, scoped, tag = 'input window, operand 1, single buffered']
    #allocation6 [shape = 's32[1]{0}', space=sflag, size = 0x4, scoped, tag = 'scoped memory for tpu_custom_call.1']
    #allocation7 [shape = 'u8[32768]{0}', space=vmem, size = 0x8000, scoped, tag = 'input window, operand 2, single buffered']
    #allocation8 [shape = 'u8[32768]{0}', space=vmem, size = 0x8000, scoped, tag = 'output window, operand 0, single buffered']
    #allocation9 [shape = 'u8[32768]{0}', space=vmem, size = 0x8000, scoped, tag = 'output window, operand 1, single buffered']
    #allocation10 [shape = 's32[1]{0}', space=sflag, size = 0x4, scoped, tag = 'scoped memory for tpu_custom_call.1']
    %10 = vsyncpa [#allocation3], 0
    %11 = vsyncpa [#allocation6], 0
    %12 = vsyncpa [#allocation4], 0
    %13 = vsyncpa [#allocation10], 0
    // Predicated region
    $region2: #{tpu_custom_call.1} parent=1 // pred_check
      _
    $region3: #{tpu_custom_call.1} parent=1 // pred_check_branch
      %15 = sbr.rel (0) target = $region5
    $region4: #{tpu_custom_call.1} parent=1 // pred_region
      %s17 = ssub.s32 1024, 1024
      %18 = vsyncadd [#allocation3], %s17
      %s19 = sshll.u32 [#allocation2], 4
      %s20 = int_to_ptr.vmem [resolvable:$true] %s19
      %25 = dma.hbm_to_vmem [thread:$0]  %s0, 1024, %s20, [#allocation3], 128, 128, 8
    $region5: #{tpu_custom_call.1} parent=1 // pred_fallthru
      _
    // Predicated region
    $region6: #{tpu_custom_call.1} parent=1 // pred_check
      _
    $region7: #{tpu_custom_call.1} parent=1 // pred_check_branch
      %27 = sbr.rel (0) target = $region9
    $region8: #{tpu_custom_call.1} parent=1 // pred_region
      %s29 = ssub.s32 1024, 1024
      %30 = vsyncadd [#allocation6], %s29
      %s31 = sshll.u32 [#allocation5], 4
      %s32 = int_to_ptr.vmem [resolvable:$true] %s31
      %37 = dma.hbm_to_vmem [thread:$0]  %s1, 1024, %s32, [#allocation6], 128, 128, 8
    $region9: #{tpu_custom_call.1} parent=1 // pred_fallthru
      _
    // Predicated region
    $region10: #{tpu_custom_call.1} parent=1 // pred_check
      _
    $region11: #{tpu_custom_call.1} parent=1 // pred_check_branch
      %39 = sbr.rel (0) target = $region13
    $region12: #{tpu_custom_call.1} parent=1 // pred_region
      %s41 = ssub.s32 1024, 1024
      %42 = vsyncadd [#allocation6], %s41
      %s43 = sshll.u32 [#allocation7], 4
      %s44 = int_to_ptr.vmem [resolvable:$true] %s43
      %49 = dma.hbm_to_vmem [thread:$0]  %s2, 1024, %s44, [#allocation6], 128, 128, 8
    $region13: #{tpu_custom_call.1} parent=1 // pred_fallthru
      _
    // Predicated region
    $region14: #{tpu_custom_call.1} parent=1 // pred_check
      _
    $region15: #{tpu_custom_call.1} parent=1 // pred_check_branch
      %51 = sbr.rel (0) target = $region17
    $region16: #{tpu_custom_call.1} parent=1 // pred_region
      %52 = dma.done [#allocation3], 1024
    $region17: #{tpu_custom_call.1} parent=1 // pred_fallthru
      _
    // Predicated region
    $region18: #{tpu_custom_call.1} parent=1 // pred_check
      _
    $region19: #{tpu_custom_call.1} parent=1 // pred_check_branch
      %54 = sbr.rel (0) target = $region21
    $region20: #{tpu_custom_call.1} parent=1 // pred_region
      %55 = dma.done [#allocation6], 1024
    $region21: #{tpu_custom_call.1} parent=1 // pred_fallthru
      _
    // Predicated region
    $region22: #{tpu_custom_call.1} parent=1 // pred_check
      _
    $region23: #{tpu_custom_call.1} parent=1 // pred_check_branch
      %57 = sbr.rel (0) target = $region25
    $region24: #{tpu_custom_call.1} parent=1 // pred_region
      %58 = dma.done [#allocation6], 1024
    $region25: #{tpu_custom_call.1} parent=1 // pred_fallthru
      _
    %v59 = vld [vmem:[#allocation2] sm:$0xff]
    %v60 = vld [vmem:[#allocation2 + $0x8] sm:$0xff]
    %v61 = vld [vmem:[#allocation2 + $0x10] sm:$0xff]
    %v62 = vld [vmem:[#allocation2 + $0x18] sm:$0xff]
    %v63 = vld [vmem:[#allocation2 + $0x20] sm:$0xff]
    %v64 = vld [vmem:[#allocation2 + $0x28] sm:$0xff]
    %v65 = vld [vmem:[#allocation2 + $0x30] sm:$0xff]
    %v66 = vld [vmem:[#allocation2 + $0x38] sm:$0xff]
    %v67 = vld [vmem:[#allocation5] sm:$0xff]
    %v68 = vld [vmem:[#allocation5 + $0x8] sm:$0xff]
    %v69 = vld [vmem:[#allocation5 + $0x10] sm:$0xff]
    %v70 = vld [vmem:[#allocation5 + $0x18] sm:$0xff]
    %v71 = vld [vmem:[#allocation5 + $0x20] sm:$0xff]
    %v72 = vld [vmem:[#allocation5 + $0x28] sm:$0xff]
    %v73 = vld [vmem:[#allocation5 + $0x30] sm:$0xff]
    %v74 = vld [vmem:[#allocation5 + $0x38] sm:$0xff]
    %v75 = vld [vmem:[#allocation7] sm:$0xff]
    %v76 = vld [vmem:[#allocation7 + $0x8] sm:$0xff]
    %v77 = vld [vmem:[#allocation7 + $0x10] sm:$0xff]
    %v78 = vld [vmem:[#allocation7 + $0x18] sm:$0xff]
    %v79 = vld [vmem:[#allocation7 + $0x20] sm:$0xff]
    %v80 = vld [vmem:[#allocation7 + $0x28] sm:$0xff]
    %v81 = vld [vmem:[#allocation7 + $0x30] sm:$0xff]
    %v82 = vld [vmem:[#allocation7 + $0x38] sm:$0xff]
    %v83 = vmul.f32 %v59, 0.17677669
    %v84 = vmul.f32 %v60, 0.17677669
    %v85 = vmul.f32 %v61, 0.17677669
    %v86 = vmul.f32 %v62, 0.17677669
    %v87 = vmul.f32 %v63, 0.17677669
    %v88 = vmul.f32 %v64, 0.17677669
    %v89 = vmul.f32 %v65, 0.17677669
    %v90 = vmul.f32 %v66, 0.17677669
    %vm91 = vcmask 261120
    %v93 = vsel %vm91, %v83, 0
    %v96 = vsel %vm91, %v67, 0
    %98 = vmatprep.subr.mxu0 0.0
    %99 = vmatpush1.xpose.msra.mxu0 0.0
    %100 = vmatprep.subr.mxu0 0.0
    %101 = vmatpush1.xpose.msra.mxu0 0.0
    %102 = vmatprep.subr.mxu0 0.0
    %103 = vmatpush1.xpose.msra.mxu0 0.0
    %104 = vmatprep.subr.mxu0 0.0
    %105 = vmatpush1.xpose.msra.mxu0 0.0
    %106 = vmatprep.subr.mxu0 0.0
    %107 = vmatpush1.xpose.msra.mxu0 0.0
    %108 = vmatprep.subr.mxu0 0.0
    %109 = vmatpush1.xpose.msra.mxu0 0.0
    %110 = vmatprep.subr.mxu0 0.0
    %111 = vmatpush1.xpose.msra.mxu0 0.0
    %112 = vmatprep.subr.mxu0 0.0
    %113 = vmatpush1.xpose.msra.mxu0 0.0
    %114 = vmatprep.subr.mxu0 0.0
    %115 = vmatpush1.xpose.msra.mxu0 0.0
    %116 = vmatprep.subr.mxu0 0.0
    %117 = vmatpush1.xpose.msra.mxu0 0.0
    %118 = vmatprep.subr.mxu0 0.0
    %119 = vmatpush1.xpose.msra.mxu0 0.0
    %120 = vmatprep.subr.mxu0 0.0
    %121 = vmatpush1.xpose.msra.mxu0 0.0
    %122 = vmatprep.subr.mxu0 0.0
    %123 = vmatpush1.xpose.msra.mxu0 0.0
    %124 = vmatprep.subr.mxu0 0.0
    %125 = vmatpush1.xpose.msra.mxu0 0.0
    %126 = vmatprep.subr.mxu0 0.0
    %127 = vmatpush1.xpose.msra.mxu0 0.0
    %128 = vmatprep.subr.mxu0 0.0
    %129 = vmatpush1.xpose.msra.mxu0 %v96
    %130 = vmatprep.subr.mxu0 0.0
    %131 = vmatpush2.xpose.msra.mxu0 0.0
    %132 = vmatprep.subr.mxu0 0.0
    %133 = vmatpush2.xpose.msra.mxu0 0.0
    %134 = vmatprep.subr.mxu0 0.0
    %135 = vmatpush2.xpose.msra.mxu0 0.0
    %136 = vmatprep.subr.mxu0 0.0
    %137 = vmatpush2.xpose.msra.mxu0 0.0
    %138 = vmatprep.subr.mxu0 0.0
    %139 = vmatpush2.xpose.msra.mxu0 0.0
    %140 = vmatprep.subr.mxu0 0.0
    %141 = vmatpush2.xpose.msra.mxu0 0.0
    %142 = vmatprep.subr.mxu0 0.0
    %143 = vmatpush2.xpose.msra.mxu0 0.0
    %144 = vmatprep.subr.mxu0 0.0
    %145 = vmatpush2.xpose.msra.mxu0 0.0
    %146 = vmatprep.subr.mxu0 0.0
    %147 = vmatpush2.xpose.msra.mxu0 0.0
    %148 = vmatprep.subr.mxu0 0.0
    %149 = vmatpush2.xpose.msra.mxu0 0.0
    %150 = vmatprep.subr.mxu0 0.0
    %151 = vmatpush2.xpose.msra.mxu0 0.0
    %152 = vmatprep.subr.mxu0 0.0
    %153 = vmatpush2.xpose.msra.mxu0 0.0
    %154 = vmatprep.subr.mxu0 0.0
    %155 = vmatpush2.xpose.msra.mxu0 0.0
    %156 = vmatprep.subr.mxu0 0.0
    %157 = vmatpush2.xpose.msra.mxu0 0.0
    %158 = vmatprep.subr.mxu0 0.0
    %159 = vmatpush2.xpose.msra.mxu0 0.0
    %160 = vmatprep.subr.mxu0 0.0
    %161 = vmatpush2.xpose.msra.mxu0 0.0
    %162 = vmatprep.mubr.f32.mxu0 0.0
    %163 = vmatmul.mubr.f32.gmra.mxu0 %v93
    %v164 = vpop.f32.mrf.mxu0
    %v165 = vadd.f32 0.0, %v164
    %v166 = vpop.f32.mrf.mxu0
    %167 = vdwg.mxu0
    %v169 = vsel %vm91, %v84, 0
    %v172 = vsel %vm91, %v68, 0
    %174 = vmatprep.subr.mxu0 0.0
    %175 = vmatpush1.xpose.msra.mxu0 0.0
    %176 = vmatprep.subr.mxu0 0.0
    %177 = vmatpush1.xpose.msra.mxu0 0.0
    %178 = vmatprep.subr.mxu0 0.0
    %179 = vmatpush1.xpose.msra.mxu0 0.0
    %180 = vmatprep.subr.mxu0 0.0
    %181 = vmatpush1.xpose.msra.mxu0 0.0
    %182 = vmatprep.subr.mxu0 0.0
    %183 = vmatpush1.xpose.msra.mxu0 0.0
    %184 = vmatprep.subr.mxu0 0.0
    %185 = vmatpush1.xpose.msra.mxu0 0.0
    %186 = vmatprep.subr.mxu0 0.0
    %187 = vmatpush1.xpose.msra.mxu0 0.0
    %188 = vmatprep.subr.mxu0 0.0
    %189 = vmatpush1.xpose.msra.mxu0 0.0
    %190 = vmatprep.subr.mxu0 0.0
    %191 = vmatpush1.xpose.msra.mxu0 0.0
    %192 = vmatprep.subr.mxu0 0.0
    %193 = vmatpush1.xpose.msra.mxu0 0.0
    %194 = vmatprep.subr.mxu0 0.0
    %195 = vmatpush1.xpose.msra.mxu0 0.0
    %196 = vmatprep.subr.mxu0 0.0
    %197 = vmatpush1.xpose.msra.mxu0 0.0
    %198 = vmatprep.subr.mxu0 0.0
    %199 = vmatpush1.xpose.msra.mxu0 0.0
    %200 = vmatprep.subr.mxu0 0.0
    %201 = vmatpush1.xpose.msra.mxu0 0.0
    %202 = vmatprep.subr.mxu0 0.0
    %203 = vmatpush1.xpose.msra.mxu0 0.0
    %204 = vmatprep.subr.mxu0 0.0
    %205 = vmatpush1.xpose.msra.mxu0 %v172
    %206 = vmatprep.subr.mxu0 0.0
    %207 = vmatpush2.xpose.msra.mxu0 0.0
    %208 = vmatprep.subr.mxu0 0.0
    %209 = vmatpush2.xpose.msra.mxu0 0.0
    %210 = vmatprep.subr.mxu0 0.0
    %211 = vmatpush2.xpose.msra.mxu0 0.0
    %212 = vmatprep.subr.mxu0 0.0
    %213 = vmatpush2.xpose.msra.mxu0 0.0
    %214 = vmatprep.subr.mxu0 0.0
    %215 = vmatpush2.xpose.msra.mxu0 0.0
    %216 = vmatprep.subr.mxu0 0.0
    %217 = vmatpush2.xpose.msra.mxu0 0.0
    %218 = vmatprep.subr.mxu0 0.0
    %219 = vmatpush2.xpose.msra.mxu0 0.0
    %220 = vmatprep.subr.mxu0 0.0
    %221 = vmatpush2.xpose.msra.mxu0 0.0
    %222 = vmatprep.subr.mxu0 0.0
    %223 = vmatpush2.xpose.msra.mxu0 0.0
    %224 = vmatprep.subr.mxu0 0.0
    %225 = vmatpush2.xpose.msra.mxu0 0.0
    %226 = vmatprep.subr.mxu0 0.0
    %227 = vmatpush2.xpose.msra.mxu0 0.0
    %228 = vmatprep.subr.mxu0 0.0
    %229 = vmatpush2.xpose.msra.mxu0 0.0
    %230 = vmatprep.subr.mxu0 0.0
    %231 = vmatpush2.xpose.msra.mxu0 0.0
    %232 = vmatprep.subr.mxu0 0.0
    %233 = vmatpush2.xpose.msra.mxu0 0.0
    %234 = vmatprep.subr.mxu0 0.0
    %235 = vmatpush2.xpose.msra.mxu0 0.0
    %236 = vmatprep.subr.mxu0 0.0
    %237 = vmatpush2.xpose.msra.mxu0 0.0
    %238 = vmatprep.mubr.f32.mxu0 0.0
    %239 = vmatmul.mubr.f32.gmra.mxu0 %v169
    %v240 = vpop.f32.mrf.mxu0
    %v241 = vadd.f32 0.0, %v240
    %v242 = vpop.f32.mrf.mxu0
    %243 = vdwg.mxu0
    %v245 = vsel %vm91, %v85, 0
    %v248 = vsel %vm91, %v69, 0
    %250 = vmatprep.subr.mxu0 0.0
    %251 = vmatpush1.xpose.msra.mxu0 0.0
    %252 = vmatprep.subr.mxu0 0.0
    %253 = vmatpush1.xpose.msra.mxu0 0.0
    %254 = vmatprep.subr.mxu0 0.0
    %255 = vmatpush1.xpose.msra.mxu0 0.0
    %256 = vmatprep.subr.mxu0 0.0
    %257 = vmatpush1.xpose.msra.mxu0 0.0
    %258 = vmatprep.subr.mxu0 0.0
    %259 = vmatpush1.xpose.msra.mxu0 0.0
    %260 = vmatprep.subr.mxu0 0.0
    %261 = vmatpush1.xpose.msra.mxu0 0.0
    %262 = vmatprep.subr.mxu0 0.0
    %263 = vmatpush1.xpose.msra.mxu0 0.0
    %264 = vmatprep.subr.mxu0 0.0
    %265 = vmatpush1.xpose.msra.mxu0 0.0
    %266 = vmatprep.subr.mxu0 0.0
    %267 = vmatpush1.xpose.msra.mxu0 0.0
    %268 = vmatprep.subr.mxu0 0.0
    %269 = vmatpush1.xpose.msra.mxu0 0.0
    %270 = vmatprep.subr.mxu0 0.0
    %271 = vmatpush1.xpose.msra.mxu0 0.0
    %272 = vmatprep.subr.mxu0 0.0
    %273 = vmatpush1.xpose.msra.mxu0 0.0
    %274 = vmatprep.subr.mxu0 0.0
    %275 = vmatpush1.xpose.msra.mxu0 0.0
    %276 = vmatprep.subr.mxu0 0.0
    %277 = vmatpush1.xpose.msra.mxu0 0.0
    %278 = vmatprep.subr.mxu0 0.0
    %279 = vmatpush1.xpose.msra.mxu0 0.0
    %280 = vmatprep.subr.mxu0 0.0
    %281 = vmatpush1.xpose.msra.mxu0 %v248
    %282 = vmatprep.subr.mxu0 0.0
    %283 = vmatpush2.xpose.msra.mxu0 0.0
    %284 = vmatprep.subr.mxu0 0.0
    %285 = vmatpush2.xpose.msra.mxu0 0.0
    %286 = vmatprep.subr.mxu0 0.0
    %287 = vmatpush2.xpose.msra.mxu0 0.0
    %288 = vmatprep.subr.mxu0 0.0
    %289 = vmatpush2.xpose.msra.mxu0 0.0
    %290 = vmatprep.subr.mxu0 0.0
    %291 = vmatpush2.xpose.msra.mxu0 0.0
    %292 = vmatprep.subr.mxu0 0.0
    %293 = vmatpush2.xpose.msra.mxu0 0.0
    %294 = vmatprep.subr.mxu0 0.0
    %295 = vmatpush2.xpose.msra.mxu0 0.0
    %296 = vmatprep.subr.mxu0 0.0
    %297 = vmatpush2.xpose.msra.mxu0 0.0
    %298 = vmatprep.subr.mxu0 0.0
    %299 = vmatpush2.xpose.msra.mxu0 0.0
    %300 = vmatprep.subr.mxu0 0.0
    %301 = vmatpush2.xpose.msra.mxu0 0.0
    %302 = vmatprep.subr.mxu0 0.0
    %303 = vmatpush2.xpose.msra.mxu0 0.0
    %304 = vmatprep.subr.mxu0 0.0
    %305 = vmatpush2.xpose.msra.mxu0 0.0
    %306 = vmatprep.subr.mxu0 0.0
    %307 = vmatpush2.xpose.msra.mxu0 0.0
    %308 = vmatprep.subr.mxu0 0.0
    %309 = vmatpush2.xpose.msra.mxu0 0.0
    %310 = vmatprep.subr.mxu0 0.0
    %311 = vmatpush2.xpose.msra.mxu0 0.0
    %312 = vmatprep.subr.mxu0 0.0
    %313 = vmatpush2.xpose.msra.mxu0 0.0
    %314 = vmatprep.mubr.f32.mxu0 0.0
    %315 = vmatmul.mubr.f32.gmra.mxu0 %v245
    %v316 = vpop.f32.mrf.mxu0
    %v317 = vadd.f32 0.0, %v316
    %v318 = vpop.f32.mrf.mxu0
    %319 = vdwg.mxu0
    %v321 = vsel %vm91, %v86, 0
    %v324 = vsel %vm91, %v70, 0
    %326 = vmatprep.subr.mxu0 0.0
    %327 = vmatpush1.xpose.msra.mxu0 0.0
    %328 = vmatprep.subr.mxu0 0.0
    %329 = vmatpush1.xpose.msra.mxu0 0.0
    %330 = vmatprep.subr.mxu0 0.0
    %331 = vmatpush1.xpose.msra.mxu0 0.0
    %332 = vmatprep.subr.mxu0 0.0
    %333 = vmatpush1.xpose.msra.mxu0 0.0
    %334 = vmatprep.subr.mxu0 0.0
    %335 = vmatpush1.xpose.msra.mxu0 0.0
    %336 = vmatprep.subr.mxu0 0.0
    %337 = vmatpush1.xpose.msra.mxu0 0.0
    %338 = vmatprep.subr.mxu0 0.0
    %339 = vmatpush1.xpose.msra.mxu0 0.0
    %340 = vmatprep.subr.mxu0 0.0
    %341 = vmatpush1.xpose.msra.mxu0 0.0
    %342 = vmatprep.subr.mxu0 0.0
    %343 = vmatpush1.xpose.msra.mxu0 0.0
    %344 = vmatprep.subr.mxu0 0.0
    %345 = vmatpush1.xpose.msra.mxu0 0.0
    %346 = vmatprep.subr.mxu0 0.0
    %347 = vmatpush1.xpose.msra.mxu0 0.0
    %348 = vmatprep.subr.mxu0 0.0
    %349 = vmatpush1.xpose.msra.mxu0 0.0
    %350 = vmatprep.subr.mxu0 0.0
    %351 = vmatpush1.xpose.msra.mxu0 0.0
    %352 = vmatprep.subr.mxu0 0.0
    %353 = vmatpush1.xpose.msra.mxu0 0.0
    %354 = vmatprep.subr.mxu0 0.0
    %355 = vmatpush1.xpose.msra.mxu0 0.0
    %356 = vmatprep.subr.mxu0 0.0
    %357 = vmatpush1.xpose.msra.mxu0 %v324
    %358 = vmatprep.subr.mxu0 0.0
    %359 = vmatpush2.xpose.msra.mxu0 0.0
    %360 = vmatprep.subr.mxu0 0.0
    %361 = vmatpush2.xpose.msra.mxu0 0.0
    %362 = vmatprep.subr.mxu0 0.0
    %363 = vmatpush2.xpose.msra.mxu0 0.0
    %364 = vmatprep.subr.mxu0 0.0
    %365 = vmatpush2.xpose.msra.mxu0 0.0
    %366 = vmatprep.subr.mxu0 0.0
    %367 = vmatpush2.xpose.msra.mxu0 0.0
    %368 = vmatprep.subr.mxu0 0.0
    %369 = vmatpush2.xpose.msra.mxu0 0.0
    %370 = vmatprep.subr.mxu0 0.0
    %371 = vmatpush2.xpose.msra.mxu0 0.0
    %372 = vmatprep.subr.mxu0 0.0
    %373 = vmatpush2.xpose.msra.mxu0 0.0
    %374 = vmatprep.subr.mxu0 0.0
    %375 = vmatpush2.xpose.msra.mxu0 0.0
    %376 = vmatprep.subr.mxu0 0.0
    %377 = vmatpush2.xpose.msra.mxu0 0.0
    %378 = vmatprep.subr.mxu0 0.0
    %379 = vmatpush2.xpose.msra.mxu0 0.0
    %380 = vmatprep.subr.mxu0 0.0
    %381 = vmatpush2.xpose.msra.mxu0 0.0
    %382 = vmatprep.subr.mxu0 0.0
    %383 = vmatpush2.xpose.msra.mxu0 0.0
    %384 = vmatprep.subr.mxu0 0.0
    %385 = vmatpush2.xpose.msra.mxu0 0.0
    %386 = vmatprep.subr.mxu0 0.0
    %387 = vmatpush2.xpose.msra.mxu0 0.0
    %388 = vmatprep.subr.mxu0 0.0
    %389 = vmatpush2.xpose.msra.mxu0 0.0
    %390 = vmatprep.mubr.f32.mxu0 0.0
    %391 = vmatmul.mubr.f32.gmra.mxu0 %v321
    %v392 = vpop.f32.mrf.mxu0
    %v393 = vadd.f32 0.0, %v392
    %v394 = vpop.f32.mrf.mxu0
    %395 = vdwg.mxu0
    %v397 = vsel %vm91, %v87, 0
    %v400 = vsel %vm91, %v71, 0
    %402 = vmatprep.subr.mxu0 0.0
    %403 = vmatpush1.xpose.msra.mxu0 0.0
    %404 = vmatprep.subr.mxu0 0.0
    %405 = vmatpush1.xpose.msra.mxu0 0.0
    %406 = vmatprep.subr.mxu0 0.0
    %407 = vmatpush1.xpose.msra.mxu0 0.0
    %408 = vmatprep.subr.mxu0 0.0
    %409 = vmatpush1.xpose.msra.mxu0 0.0
    %410 = vmatprep.subr.mxu0 0.0
    %411 = vmatpush1.xpose.msra.mxu0 0.0
    %412 = vmatprep.subr.mxu0 0.0
    %413 = vmatpush1.xpose.msra.mxu0 0.0
    %414 = vmatprep.subr.mxu0 0.0
    %415 = vmatpush1.xpose.msra.mxu0 0.0
    %416 = vmatprep.subr.mxu0 0.0
    %417 = vmatpush1.xpose.msra.mxu0 0.0
    %418 = vmatprep.subr.mxu0 0.0
    %419 = vmatpush1.xpose.msra.mxu0 0.0
    %420 = vmatprep.subr.mxu0 0.0
    %421 = vmatpush1.xpose.msra.mxu0 0.0
    %422 = vmatprep.subr.mxu0 0.0
    %423 = vmatpush1.xpose.msra.mxu0 0.0
    %424 = vmatprep.subr.mxu0 0.0
    %425 = vmatpush1.xpose.msra.mxu0 0.0
    %426 = vmatprep.subr.mxu0 0.0
    %427 = vmatpush1.xpose.msra.mxu0 0.0
    %428 = vmatprep.subr.mxu0 0.0
    %429 = vmatpush1.xpose.msra.mxu0 0.0
    %430 = vmatprep.subr.mxu0 0.0
    %431 = vmatpush1.xpose.msra.mxu0 0.0
    %432 = vmatprep.subr.mxu0 0.0
    %433 = vmatpush1.xpose.msra.mxu0 %v400
    %434 = vmatprep.subr.mxu0 0.0
    %435 = vmatpush2.xpose.msra.mxu0 0.0
    %436 = vmatprep.subr.mxu0 0.0
    %437 = vmatpush2.xpose.msra.mxu0 0.0
    %438 = vmatprep.subr.mxu0 0.0
    %439 = vmatpush2.xpose.msra.mxu0 0.0
    %440 = vmatprep.subr.mxu0 0.0
    %441 = vmatpush2.xpose.msra.mxu0 0.0
    %442 = vmatprep.subr.mxu0 0.0
    %443 = vmatpush2.xpose.msra.mxu0 0.0
    %444 = vmatprep.subr.mxu0 0.0
    %445 = vmatpush2.xpose.msra.mxu0 0.0
    %446 = vmatprep.subr.mxu0 0.0
    %447 = vmatpush2.xpose.msra.mxu0 0.0
    %448 = vmatprep.subr.mxu0 0.0
    %449 = vmatpush2.xpose.msra.mxu0 0.0
    %450 = vmatprep.subr.mxu0 0.0
    %451 = vmatpush2.xpose.msra.mxu0 0.0
    %452 = vmatprep.subr.mxu0 0.0
    %453 = vmatpush2.xpose.msra.mxu0 0.0
    %454 = vmatprep.subr.mxu0 0.0
    %455 = vmatpush2.xpose.msra.mxu0 0.0
    %456 = vmatprep.subr.mxu0 0.0
    %457 = vmatpush2.xpose.msra.mxu0 0.0
    %458 = vmatprep.subr.mxu0 0.0
    %459 = vmatpush2.xpose.msra.mxu0 0.0
    %460 = vmatprep.subr.mxu0 0.0
    %461 = vmatpush2.xpose.msra.mxu0 0.0
    %462 = vmatprep.subr.mxu0 0.0
    %463 = vmatpush2.xpose.msra.mxu0 0.0
    %464 = vmatprep.subr.mxu0 0.0
    %465 = vmatpush2.xpose.msra.mxu0 0.0
    %466 = vmatprep.mubr.f32.mxu0 0.0
    %467 = vmatmul.mubr.f32.gmra.mxu0 %v397
    %v468 = vpop.f32.mrf.mxu0
    %v469 = vadd.f32 0.0, %v468
    %v470 = vpop.f32.mrf.mxu0
    %471 = vdwg.mxu0
    %v473 = vsel %vm91, %v88, 0
    %v476 = vsel %vm91, %v72, 0
    %478 = vmatprep.subr.mxu0 0.0
    %479 = vmatpush1.xpose.msra.mxu0 0.0
    %480 = vmatprep.subr.mxu0 0.0
    %481 = vmatpush1.xpose.msra.mxu0 0.0
    %482 = vmatprep.subr.mxu0 0.0
    %483 = vmatpush1.xpose.msra.mxu0 0.0
    %484 = vmatprep.subr.mxu0 0.0
    %485 = vmatpush1.xpose.msra.mxu0 0.0
    %486 = vmatprep.subr.mxu0 0.0
    %487 = vmatpush1.xpose.msra.mxu0 0.0
    %488 = vmatprep.subr.mxu0 0.0
    %489 = vmatpush1.xpose.msra.mxu0 0.0
    %490 = vmatprep.subr.mxu0 0.0
    %491 = vmatpush1.xpose.msra.mxu0 0.0
    %492 = vmatprep.subr.mxu0 0.0
    %493 = vmatpush1.xpose.msra.mxu0 0.0
    %494 = vmatprep.subr.mxu0 0.0
    %495 = vmatpush1.xpose.msra.mxu0 0.0
    %496 = vmatprep.subr.mxu0 0.0
    %497 = vmatpush1.xpose.msra.mxu0 0.0
    %498 = vmatprep.subr.mxu0 0.0
    %499 = vmatpush1.xpose.msra.mxu0 0.0
    %500 = vmatprep.subr.mxu0 0.0
    %501 = vmatpush1.xpose.msra.mxu0 0.0
    %502 = vmatprep.subr.mxu0 0.0
    %503 = vmatpush1.xpose.msra.mxu0 0.0
    %504 = vmatprep.subr.mxu0 0.0
    %505 = vmatpush1.xpose.msra.mxu0 0.0
    %506 = vmatprep.subr.mxu0 0.0
    %507 = vmatpush1.xpose.msra.mxu0 0.0
    %508 = vmatprep.subr.mxu0 0.0
    %509 = vmatpush1.xpose.msra.mxu0 %v476
    %510 = vmatprep.subr.mxu0 0.0
    %511 = vmatpush2.xpose.msra.mxu0 0.0
    %512 = vmatprep.subr.mxu0 0.0
    %513 = vmatpush2.xpose.msra.mxu0 0.0
    %514 = vmatprep.subr.mxu0 0.0
    %515 = vmatpush2.xpose.msra.mxu0 0.0
    %516 = vmatprep.subr.mxu0 0.0
    %517 = vmatpush2.xpose.msra.mxu0 0.0
    %518 = vmatprep.subr.mxu0 0.0
    %519 = vmatpush2.xpose.msra.mxu0 0.0
    %520 = vmatprep.subr.mxu0 0.0
    %521 = vmatpush2.xpose.msra.mxu0 0.0
    %522 = vmatprep.subr.mxu0 0.0
    %523 = vmatpush2.xpose.msra.mxu0 0.0
    %524 = vmatprep.subr.mxu0 0.0
    %525 = vmatpush2.xpose.msra.mxu0 0.0
    %526 = vmatprep.subr.mxu0 0.0
    %527 = vmatpush2.xpose.msra.mxu0 0.0
    %528 = vmatprep.subr.mxu0 0.0
    %529 = vmatpush2.xpose.msra.mxu0 0.0
    %530 = vmatprep.subr.mxu0 0.0
    %531 = vmatpush2.xpose.msra.mxu0 0.0
    %532 = vmatprep.subr.mxu0 0.0
    %533 = vmatpush2.xpose.msra.mxu0 0.0
    %534 = vmatprep.subr.mxu0 0.0
    %535 = vmatpush2.xpose.msra.mxu0 0.0
    %536 = vmatprep.subr.mxu0 0.0
    %537 = vmatpush2.xpose.msra.mxu0 0.0
    %538 = vmatprep.subr.mxu0 0.0
    %539 = vmatpush2.xpose.msra.mxu0 0.0
    %540 = vmatprep.subr.mxu0 0.0
    %541 = vmatpush2.xpose.msra.mxu0 0.0
    %542 = vmatprep.mubr.f32.mxu0 0.0
    %543 = vmatmul.mubr.f32.gmra.mxu0 %v473
    %v544 = vpop.f32.mrf.mxu0
    %v545 = vadd.f32 0.0, %v544
    %v546 = vpop.f32.mrf.mxu0
    %547 = vdwg.mxu0
    %v549 = vsel %vm91, %v89, 0
    %v552 = vsel %vm91, %v73, 0
    %554 = vmatprep.subr.mxu0 0.0
    %555 = vmatpush1.xpose.msra.mxu0 0.0
    %556 = vmatprep.subr.mxu0 0.0
    %557 = vmatpush1.xpose.msra.mxu0 0.0
    %558 = vmatprep.subr.mxu0 0.0
    %559 = vmatpush1.xpose.msra.mxu0 0.0
    %560 = vmatprep.subr.mxu0 0.0
    %561 = vmatpush1.xpose.msra.mxu0 0.0
    %562 = vmatprep.subr.mxu0 0.0
    %563 = vmatpush1.xpose.msra.mxu0 0.0
    %564 = vmatprep.subr.mxu0 0.0
    %565 = vmatpush1.xpose.msra.mxu0 0.0
    %566 = vmatprep.subr.mxu0 0.0
    %567 = vmatpush1.xpose.msra.mxu0 0.0
    %568 = vmatprep.subr.mxu0 0.0
    %569 = vmatpush1.xpose.msra.mxu0 0.0
    %570 = vmatprep.subr.mxu0 0.0
    %571 = vmatpush1.xpose.msra.mxu0 0.0
    %572 = vmatprep.subr.mxu0 0.0
    %573 = vmatpush1.xpose.msra.mxu0 0.0
    %574 = vmatprep.subr.mxu0 0.0
    %575 = vmatpush1.xpose.msra.mxu0 0.0
    %576 = vmatprep.subr.mxu0 0.0
    %577 = vmatpush1.xpose.msra.mxu0 0.0
    %578 = vmatprep.subr.mxu0 0.0
    %579 = vmatpush1.xpose.msra.mxu0 0.0
    %580 = vmatprep.subr.mxu0 0.0
    %581 = vmatpush1.xpose.msra.mxu0 0.0
    %582 = vmatprep.subr.mxu0 0.0
    %583 = vmatpush1.xpose.msra.mxu0 0.0
    %584 = vmatprep.subr.mxu0 0.0
    %585 = vmatpush1.xpose.msra.mxu0 %v552
    %586 = vmatprep.subr.mxu0 0.0
    %587 = vmatpush2.xpose.msra.mxu0 0.0
    %588 = vmatprep.subr.mxu0 0.0
    %589 = vmatpush2.xpose.msra.mxu0 0.0
    %590 = vmatprep.subr.mxu0 0.0
    %591 = vmatpush2.xpose.msra.mxu0 0.0
    %592 = vmatprep.subr.mxu0 0.0
    %593 = vmatpush2.xpose.msra.mxu0 0.0
    %594 = vmatprep.subr.mxu0 0.0
    %595 = vmatpush2.xpose.msra.mxu0 0.0
    %596 = vmatprep.subr.mxu0 0.0
    %597 = vmatpush2.xpose.msra.mxu0 0.0
    %598 = vmatprep.subr.mxu0 0.0
    %599 = vmatpush2.xpose.msra.mxu0 0.0
    %600 = vmatprep.subr.mxu0 0.0
    %601 = vmatpush2.xpose.msra.mxu0 0.0
    %602 = vmatprep.subr.mxu0 0.0
    %603 = vmatpush2.xpose.msra.mxu0 0.0
    %604 = vmatprep.subr.mxu0 0.0
    %605 = vmatpush2.xpose.msra.mxu0 0.0
    %606 = vmatprep.subr.mxu0 0.0
    %607 = vmatpush2.xpose.msra.mxu0 0.0
    %608 = vmatprep.subr.mxu0 0.0
    %609 = vmatpush2.xpose.msra.mxu0 0.0
    %610 = vmatprep.subr.mxu0 0.0
    %611 = vmatpush2.xpose.msra.mxu0 0.0
    %612 = vmatprep.subr.mxu0 0.0
    %613 = vmatpush2.xpose.msra.mxu0 0.0
    %614 = vmatprep.subr.mxu0 0.0
    %615 = vmatpush2.xpose.msra.mxu0 0.0
    %616 = vmatprep.subr.mxu0 0.0
    %617 = vmatpush2.xpose.msra.mxu0 0.0
    %618 = vmatprep.mubr.f32.mxu0 0.0
    %619 = vmatmul.mubr.f32.gmra.mxu0 %v549
    %v620 = vpop.f32.mrf.mxu0
    %v621 = vadd.f32 0.0, %v620
    %v622 = vpop.f32.mrf.mxu0
    %623 = vdwg.mxu0
    %v625 = vsel %vm91, %v90, 0
    %v628 = vsel %vm91, %v74, 0
    %630 = vmatprep.subr.mxu0 0.0
    %631 = vmatpush1.xpose.msra.mxu0 0.0
    %632 = vmatprep.subr.mxu0 0.0
    %633 = vmatpush1.xpose.msra.mxu0 0.0
    %634 = vmatprep.subr.mxu0 0.0
    %635 = vmatpush1.xpose.msra.mxu0 0.0
    %636 = vmatprep.subr.mxu0 0.0
    %637 = vmatpush1.xpose.msra.mxu0 0.0
    %638 = vmatprep.subr.mxu0 0.0
    %639 = vmatpush1.xpose.msra.mxu0 0.0
    %640 = vmatprep.subr.mxu0 0.0
    %641 = vmatpush1.xpose.msra.mxu0 0.0
    %642 = vmatprep.subr.mxu0 0.0
    %643 = vmatpush1.xpose.msra.mxu0 0.0
    %644 = vmatprep.subr.mxu0 0.0
    %645 = vmatpush1.xpose.msra.mxu0 0.0
    %646 = vmatprep.subr.mxu0 0.0
    %647 = vmatpush1.xpose.msra.mxu0 0.0
    %648 = vmatprep.subr.mxu0 0.0
    %649 = vmatpush1.xpose.msra.mxu0 0.0
    %650 = vmatprep.subr.mxu0 0.0
    %651 = vmatpush1.xpose.msra.mxu0 0.0
    %652 = vmatprep.subr.mxu0 0.0
    %653 = vmatpush1.xpose.msra.mxu0 0.0
    %654 = vmatprep.subr.mxu0 0.0
    %655 = vmatpush1.xpose.msra.mxu0 0.0
    %656 = vmatprep.subr.mxu0 0.0
    %657 = vmatpush1.xpose.msra.mxu0 0.0
    %658 = vmatprep.subr.mxu0 0.0
    %659 = vmatpush1.xpose.msra.mxu0 0.0
    %660 = vmatprep.subr.mxu0 0.0
    %661 = vmatpush1.xpose.msra.mxu0 %v628
    %662 = vmatprep.subr.mxu0 0.0
    %663 = vmatpush2.xpose.msra.mxu0 0.0
    %664 = vmatprep.subr.mxu0 0.0
    %665 = vmatpush2.xpose.msra.mxu0 0.0
    %666 = vmatprep.subr.mxu0 0.0
    %667 = vmatpush2.xpose.msra.mxu0 0.0
    %668 = vmatprep.subr.mxu0 0.0
    %669 = vmatpush2.xpose.msra.mxu0 0.0
    %670 = vmatprep.subr.mxu0 0.0
    %671 = vmatpush2.xpose.msra.mxu0 0.0
    %672 = vmatprep.subr.mxu0 0.0
    %673 = vmatpush2.xpose.msra.mxu0 0.0
    %674 = vmatprep.subr.mxu0 0.0
    %675 = vmatpush2.xpose.msra.mxu0 0.0
    %676 = vmatprep.subr.mxu0 0.0
    %677 = vmatpush2.xpose.msra.mxu0 0.0
    %678 = vmatprep.subr.mxu0 0.0
    %679 = vmatpush2.xpose.msra.mxu0 0.0
    %680 = vmatprep.subr.mxu0 0.0
    %681 = vmatpush2.xpose.msra.mxu0 0.0
    %682 = vmatprep.subr.mxu0 0.0
    %683 = vmatpush2.xpose.msra.mxu0 0.0
    %684 = vmatprep.subr.mxu0 0.0
    %685 = vmatpush2.xpose.msra.mxu0 0.0
    %686 = vmatprep.subr.mxu0 0.0
    %687 = vmatpush2.xpose.msra.mxu0 0.0
    %688 = vmatprep.subr.mxu0 0.0
    %689 = vmatpush2.xpose.msra.mxu0 0.0
    %690 = vmatprep.subr.mxu0 0.0
    %691 = vmatpush2.xpose.msra.mxu0 0.0
    %692 = vmatprep.subr.mxu0 0.0
    %693 = vmatpush2.xpose.msra.mxu0 0.0
    %694 = vmatprep.mubr.f32.mxu0 0.0
    %695 = vmatmul.mubr.f32.gmra.mxu0 %v625
    %v696 = vpop.f32.mrf.mxu0
    %v697 = vadd.f32 0.0, %v696
    %v698 = vpop.f32.mrf.mxu0
    %699 = vdwg.mxu0
    %vm700 = vcmask 64512
    %v701 = vsel %vm700, %v165, -inf
    %702 = vmax.xlane.f32.xlu0 %v701
    %v703 = vpop.xlane.xlu0 %702
    %v704 = vsel %vm700, %v241, -inf
    %705 = vmax.xlane.f32.xlu0 %v704
    %v706 = vpop.xlane.xlu0 %705
    %v707 = vsel %vm700, %v317, -inf
    %708 = vmax.xlane.f32.xlu0 %v707
    %v709 = vpop.xlane.xlu0 %708
    %v710 = vsel %vm700, %v393, -inf
    %711 = vmax.xlane.f32.xlu0 %v710
    %v712 = vpop.xlane.xlu0 %711
    %v713 = vsel %vm700, %v469, -inf
    %714 = vmax.xlane.f32.xlu0 %v713
    %v715 = vpop.xlane.xlu0 %714
    %v716 = vsel %vm700, %v545, -inf
    %717 = vmax.xlane.f32.xlu0 %v716
    %v718 = vpop.xlane.xlu0 %717
    %v719 = vsel %vm700, %v621, -inf
    %720 = vmax.xlane.f32.xlu0 %v719
    %v721 = vpop.xlane.xlu0 %720
    %v722 = vsel %vm700, %v697, -inf
    %723 = vmax.xlane.f32.xlu0 %v722
    %v724 = vpop.xlane.xlu0 %723
    %v725 = vsub.f32 %v165, %v703
    %v726 = vsub.f32 %v241, %v706
    %v727 = vsub.f32 %v317, %v709
    %v728 = vsub.f32 %v393, %v712
    %v729 = vsub.f32 %v469, %v715
    %v730 = vsub.f32 %v545, %v718
    %v731 = vsub.f32 %v621, %v721
    %v732 = vsub.f32 %v697, %v724
    %v733 = vmul.f32 %v725, 1.442695
    %v734 = vpow.pop %v733
    %v735 = vmul.f32 %v726, 1.442695
    %v736 = vpow.pop %v735
    %v737 = vmul.f32 %v727, 1.442695
    %v738 = vpow.pop %v737
    %v739 = vmul.f32 %v728, 1.442695
    %v740 = vpow.pop %v739
    %v741 = vmul.f32 %v729, 1.442695
    %v742 = vpow.pop %v741
    %v743 = vmul.f32 %v730, 1.442695
    %v744 = vpow.pop %v743
    %v745 = vmul.f32 %v731, 1.442695
    %v746 = vpow.pop %v745
    %v747 = vmul.f32 %v732, 1.442695
    %v748 = vpow.pop %v747
    %v749 = vsel %vm700, %v734, 0.0
    %750 = vadd.xlane.f32.xlu0 %v749
    %v751 = vpop.xlane.xlu0 %750
    %v752 = vsel %vm700, %v736, 0.0
    %753 = vadd.xlane.f32.xlu0 %v752
    %v754 = vpop.xlane.xlu0 %753
    %v755 = vsel %vm700, %v738, 0.0
    %756 = vadd.xlane.f32.xlu0 %v755
    %v757 = vpop.xlane.xlu0 %756
    %v758 = vsel %vm700, %v740, 0.0
    %759 = vadd.xlane.f32.xlu0 %v758
    %v760 = vpop.xlane.xlu0 %759
    %v761 = vsel %vm700, %v742, 0.0
    %762 = vadd.xlane.f32.xlu0 %v761
    %v763 = vpop.xlane.xlu0 %762
    %v764 = vsel %vm700, %v744, 0.0
    %765 = vadd.xlane.f32.xlu0 %v764
    %v766 = vpop.xlane.xlu0 %765
    %v767 = vsel %vm700, %v746, 0.0
    %768 = vadd.xlane.f32.xlu0 %v767
    %v769 = vpop.xlane.xlu0 %768
    %v770 = vsel %vm700, %v748, 0.0
    %771 = vadd.xlane.f32.xlu0 %v770
    %v772 = vpop.xlane.xlu0 %771
    %v774 = vsel %vm700, %v734, 0
    %776 = vmatprep.subr.mxu0 0.0
    %777 = vmatpush1.msra.mxu0 0.0
    %778 = vmatprep.subr.mxu0 0.0
    %779 = vmatpush1.msra.mxu0 0.0
    %780 = vmatprep.subr.mxu0 0.0
    %781 = vmatpush1.msra.mxu0 0.0
    %782 = vmatprep.subr.mxu0 0.0
    %783 = vmatpush1.msra.mxu0 0.0
    %784 = vmatprep.subr.mxu0 0.0
    %785 = vmatpush1.msra.mxu0 0.0
    %786 = vmatprep.subr.mxu0 0.0
    %787 = vmatpush1.msra.mxu0 0.0
    %788 = vmatprep.subr.mxu0 0.0
    %789 = vmatpush1.msra.mxu0 0.0
    %790 = vmatprep.subr.mxu0 0.0
    %791 = vmatpush1.msra.mxu0 0.0
    %792 = vmatprep.subr.mxu0 0.0
    %793 = vmatpush1.msra.mxu0 0.0
    %794 = vmatprep.subr.mxu0 0.0
    %795 = vmatpush1.msra.mxu0 0.0
    %796 = vmatprep.subr.mxu0 0.0
    %797 = vmatpush1.msra.mxu0 0.0
    %798 = vmatprep.subr.mxu0 0.0
    %799 = vmatpush1.msra.mxu0 0.0
    %800 = vmatprep.subr.mxu0 0.0
    %801 = vmatpush1.msra.mxu0 0.0
    %802 = vmatprep.subr.mxu0 0.0
    %803 = vmatpush1.msra.mxu0 0.0
    %804 = vmatprep.subr.mxu0 0.0
    %805 = vmatpush1.msra.mxu0 0.0
    %806 = vmatprep.subr.mxu0 0.0
    %807 = vmatpush1.msra.mxu0 %v75
    %808 = vmatprep.subr.mxu0 0.0
    %809 = vmatpush2.msra.mxu0 0.0
    %810 = vmatprep.subr.mxu0 0.0
    %811 = vmatpush2.msra.mxu0 0.0
    %812 = vmatprep.subr.mxu0 0.0
    %813 = vmatpush2.msra.mxu0 0.0
    %814 = vmatprep.subr.mxu0 0.0
    %815 = vmatpush2.msra.mxu0 0.0
    %816 = vmatprep.subr.mxu0 0.0
    %817 = vmatpush2.msra.mxu0 0.0
    %818 = vmatprep.subr.mxu0 0.0
    %819 = vmatpush2.msra.mxu0 0.0
    %820 = vmatprep.subr.mxu0 0.0
    %821 = vmatpush2.msra.mxu0 0.0
    %822 = vmatprep.subr.mxu0 0.0
    %823 = vmatpush2.msra.mxu0 0.0
    %824 = vmatprep.subr.mxu0 0.0
    %825 = vmatpush2.msra.mxu0 0.0
    %826 = vmatprep.subr.mxu0 0.0
    %827 = vmatpush2.msra.mxu0 0.0
    %828 = vmatprep.subr.mxu0 0.0
    %829 = vmatpush2.msra.mxu0 0.0
    %830 = vmatprep.subr.mxu0 0.0
    %831 = vmatpush2.msra.mxu0 0.0
    %832 = vmatprep.subr.mxu0 0.0
    %833 = vmatpush2.msra.mxu0 0.0
    %834 = vmatprep.subr.mxu0 0.0
    %835 = vmatpush2.msra.mxu0 0.0
    %836 = vmatprep.subr.mxu0 0.0
    %837 = vmatpush2.msra.mxu0 0.0
    %838 = vmatprep.subr.mxu0 0.0
    %839 = vmatpush2.msra.mxu0 0.0
    %840 = vmatprep.mubr.f32.mxu0 0.0
    %841 = vmatmul.mubr.f32.gmra.mxu0 %v774
    %v842 = vpop.f32.mrf.mxu0
    %v843 = vadd.f32 0.0, %v842
    %v844 = vpop.f32.mrf.mxu0
    %845 = vdwg.mxu0
    %v847 = vsel %vm700, %v736, 0
    %849 = vmatprep.subr.mxu0 0.0
    %850 = vmatpush1.msra.mxu0 0.0
    %851 = vmatprep.subr.mxu0 0.0
    %852 = vmatpush1.msra.mxu0 0.0
    %853 = vmatprep.subr.mxu0 0.0
    %854 = vmatpush1.msra.mxu0 0.0
    %855 = vmatprep.subr.mxu0 0.0
    %856 = vmatpush1.msra.mxu0 0.0
    %857 = vmatprep.subr.mxu0 0.0
    %858 = vmatpush1.msra.mxu0 0.0
    %859 = vmatprep.subr.mxu0 0.0
    %860 = vmatpush1.msra.mxu0 0.0
    %861 = vmatprep.subr.mxu0 0.0
    %862 = vmatpush1.msra.mxu0 0.0
    %863 = vmatprep.subr.mxu0 0.0
    %864 = vmatpush1.msra.mxu0 0.0
    %865 = vmatprep.subr.mxu0 0.0
    %866 = vmatpush1.msra.mxu0 0.0
    %867 = vmatprep.subr.mxu0 0.0
    %868 = vmatpush1.msra.mxu0 0.0
    %869 = vmatprep.subr.mxu0 0.0
    %870 = vmatpush1.msra.mxu0 0.0
    %871 = vmatprep.subr.mxu0 0.0
    %872 = vmatpush1.msra.mxu0 0.0
    %873 = vmatprep.subr.mxu0 0.0
    %874 = vmatpush1.msra.mxu0 0.0
    %875 = vmatprep.subr.mxu0 0.0
    %876 = vmatpush1.msra.mxu0 0.0
    %877 = vmatprep.subr.mxu0 0.0
    %878 = vmatpush1.msra.mxu0 0.0
    %879 = vmatprep.subr.mxu0 0.0
    %880 = vmatpush1.msra.mxu0 %v76
    %881 = vmatprep.subr.mxu0 0.0
    %882 = vmatpush2.msra.mxu0 0.0
    %883 = vmatprep.subr.mxu0 0.0
    %884 = vmatpush2.msra.mxu0 0.0
    %885 = vmatprep.subr.mxu0 0.0
    %886 = vmatpush2.msra.mxu0 0.0
    %887 = vmatprep.subr.mxu0 0.0
    %888 = vmatpush2.msra.mxu0 0.0
    %889 = vmatprep.subr.mxu0 0.0
    %890 = vmatpush2.msra.mxu0 0.0
    %891 = vmatprep.subr.mxu0 0.0
    %892 = vmatpush2.msra.mxu0 0.0
    %893 = vmatprep.subr.mxu0 0.0
    %894 = vmatpush2.msra.mxu0 0.0
    %895 = vmatprep.subr.mxu0 0.0
    %896 = vmatpush2.msra.mxu0 0.0
    %897 = vmatprep.subr.mxu0 0.0
    %898 = vmatpush2.msra.mxu0 0.0
    %899 = vmatprep.subr.mxu0 0.0
    %900 = vmatpush2.msra.mxu0 0.0
    %901 = vmatprep.subr.mxu0 0.0
    %902 = vmatpush2.msra.mxu0 0.0
    %903 = vmatprep.subr.mxu0 0.0
    %904 = vmatpush2.msra.mxu0 0.0
    %905 = vmatprep.subr.mxu0 0.0
    %906 = vmatpush2.msra.mxu0 0.0
    %907 = vmatprep.subr.mxu0 0.0
    %908 = vmatpush2.msra.mxu0 0.0
    %909 = vmatprep.subr.mxu0 0.0
    %910 = vmatpush2.msra.mxu0 0.0
    %911 = vmatprep.subr.mxu0 0.0
    %912 = vmatpush2.msra.mxu0 0.0
    %913 = vmatprep.mubr.f32.mxu0 0.0
    %914 = vmatmul.mubr.f32.gmra.mxu0 %v847
    %v915 = vpop.f32.mrf.mxu0
    %v916 = vadd.f32 0.0, %v915
    %v917 = vpop.f32.mrf.mxu0
    %918 = vdwg.mxu0
    %v920 = vsel %vm700, %v738, 0
    %922 = vmatprep.subr.mxu0 0.0
    %923 = vmatpush1.msra.mxu0 0.0
    %924 = vmatprep.subr.mxu0 0.0
    %925 = vmatpush1.msra.mxu0 0.0
    %926 = vmatprep.subr.mxu0 0.0
    %927 = vmatpush1.msra.mxu0 0.0
    %928 = vmatprep.subr.mxu0 0.0
    %929 = vmatpush1.msra.mxu0 0.0
    %930 = vmatprep.subr.mxu0 0.0
    %931 = vmatpush1.msra.mxu0 0.0
    %932 = vmatprep.subr.mxu0 0.0
    %933 = vmatpush1.msra.mxu0 0.0
    %934 = vmatprep.subr.mxu0 0.0
    %935 = vmatpush1.msra.mxu0 0.0
    %936 = vmatprep.subr.mxu0 0.0
    %937 = vmatpush1.msra.mxu0 0.0
    %938 = vmatprep.subr.mxu0 0.0
    %939 = vmatpush1.msra.mxu0 0.0
    %940 = vmatprep.subr.mxu0 0.0
    %941 = vmatpush1.msra.mxu0 0.0
    %942 = vmatprep.subr.mxu0 0.0
    %943 = vmatpush1.msra.mxu0 0.0
    %944 = vmatprep.subr.mxu0 0.0
    %945 = vmatpush1.msra.mxu0 0.0
    %946 = vmatprep.subr.mxu0 0.0
    %947 = vmatpush1.msra.mxu0 0.0
    %948 = vmatprep.subr.mxu0 0.0
    %949 = vmatpush1.msra.mxu0 0.0
    %950 = vmatprep.subr.mxu0 0.0
    %951 = vmatpush1.msra.mxu0 0.0
    %952 = vmatprep.subr.mxu0 0.0
    %953 = vmatpush1.msra.mxu0 %v77
    %954 = vmatprep.subr.mxu0 0.0
    %955 = vmatpush2.msra.mxu0 0.0
    %956 = vmatprep.subr.mxu0 0.0
    %957 = vmatpush2.msra.mxu0 0.0
    %958 = vmatprep.subr.mxu0 0.0
    %959 = vmatpush2.msra.mxu0 0.0
    %960 = vmatprep.subr.mxu0 0.0
    %961 = vmatpush2.msra.mxu0 0.0
    %962 = vmatprep.subr.mxu0 0.0
    %963 = vmatpush2.msra.mxu0 0.0
    %964 = vmatprep.subr.mxu0 0.0
    %965 = vmatpush2.msra.mxu0 0.0
    %966 = vmatprep.subr.mxu0 0.0
    %967 = vmatpush2.msra.mxu0 0.0
    %968 = vmatprep.subr.mxu0 0.0
    %969 = vmatpush2.msra.mxu0 0.0
    %970 = vmatprep.subr.mxu0 0.0
    %971 = vmatpush2.msra.mxu0 0.0
    %972 = vmatprep.subr.mxu0 0.0
    %973 = vmatpush2.msra.mxu0 0.0
    %974 = vmatprep.subr.mxu0 0.0
    %975 = vmatpush2.msra.mxu0 0.0
    %976 = vmatprep.subr.mxu0 0.0
    %977 = vmatpush2.msra.mxu0 0.0
    %978 = vmatprep.subr.mxu0 0.0
    %979 = vmatpush2.msra.mxu0 0.0
    %980 = vmatprep.subr.mxu0 0.0
    %981 = vmatpush2.msra.mxu0 0.0
    %982 = vmatprep.subr.mxu0 0.0
    %983 = vmatpush2.msra.mxu0 0.0
    %984 = vmatprep.subr.mxu0 0.0
    %985 = vmatpush2.msra.mxu0 0.0
    %986 = vmatprep.mubr.f32.mxu0 0.0
    %987 = vmatmul.mubr.f32.gmra.mxu0 %v920
    %v988 = vpop.f32.mrf.mxu0
    %v989 = vadd.f32 0.0, %v988
    %v990 = vpop.f32.mrf.mxu0
    %991 = vdwg.mxu0
    %v993 = vsel %vm700, %v740, 0
    %995 = vmatprep.subr.mxu0 0.0
    %996 = vmatpush1.msra.mxu0 0.0
    %997 = vmatprep.subr.mxu0 0.0
    %998 = vmatpush1.msra.mxu0 0.0
    %999 = vmatprep.subr.mxu0 0.0
    %1000 = vmatpush1.msra.mxu0 0.0
    %1001 = vmatprep.subr.mxu0 0.0
    %1002 = vmatpush1.msra.mxu0 0.0
    %1003 = vmatprep.subr.mxu0 0.0
    %1004 = vmatpush1.msra.mxu0 0.0
    %1005 = vmatprep.subr.mxu0 0.0
    %1006 = vmatpush1.msra.mxu0 0.0
    %1007 = vmatprep.subr.mxu0 0.0
    %1008 = vmatpush1.msra.mxu0 0.0
    %1009 = vmatprep.subr.mxu0 0.0
    %1010 = vmatpush1.msra.mxu0 0.0
    %1011 = vmatprep.subr.mxu0 0.0
    %1012 = vmatpush1.msra.mxu0 0.0
    %1013 = vmatprep.subr.mxu0 0.0
    %1014 = vmatpush1.msra.mxu0 0.0
    %1015 = vmatprep.subr.mxu0 0.0
    %1016 = vmatpush1.msra.mxu0 0.0
    %1017 = vmatprep.subr.mxu0 0.0
    %1018 = vmatpush1.msra.mxu0 0.0
    %1019 = vmatprep.subr.mxu0 0.0
    %1020 = vmatpush1.msra.mxu0 0.0
    %1021 = vmatprep.subr.mxu0 0.0
    %1022 = vmatpush1.msra.mxu0 0.0
    %1023 = vmatprep.subr.mxu0 0.0
    %1024 = vmatpush1.msra.mxu0 0.0
    %1025 = vmatprep.subr.mxu0 0.0
    %1026 = vmatpush1.msra.mxu0 %v78
    %1027 = vmatprep.subr.mxu0 0.0
    %1028 = vmatpush2.msra.mxu0 0.0
    %1029 = vmatprep.subr.mxu0 0.0
    %1030 = vmatpush2.msra.mxu0 0.0
    %1031 = vmatprep.subr.mxu0 0.0
    %1032 = vmatpush2.msra.mxu0 0.0
    %1033 = vmatprep.subr.mxu0 0.0
    %1034 = vmatpush2.msra.mxu0 0.0
    %1035 = vmatprep.subr.mxu0 0.0
    %1036 = vmatpush2.msra.mxu0 0.0
    %1037 = vmatprep.subr.mxu0 0.0
    %1038 = vmatpush2.msra.mxu0 0.0
    %1039 = vmatprep.subr.mxu0 0.0
    %1040 = vmatpush2.msra.mxu0 0.0
    %1041 = vmatprep.subr.mxu0 0.0
    %1042 = vmatpush2.msra.mxu0 0.0
    %1043 = vmatprep.subr.mxu0 0.0
    %1044 = vmatpush2.msra.mxu0 0.0
    %1045 = vmatprep.subr.mxu0 0.0
    %1046 = vmatpush2.msra.mxu0 0.0
    %1047 = vmatprep.subr.mxu0 0.0
    %1048 = vmatpush2.msra.mxu0 0.0
    %1049 = vmatprep.subr.mxu0 0.0
    %1050 = vmatpush2.msra.mxu0 0.0
    %1051 = vmatprep.subr.mxu0 0.0
    %1052 = vmatpush2.msra.mxu0 0.0
    %1053 = vmatprep.subr.mxu0 0.0
    %1054 = vmatpush2.msra.mxu0 0.0
    %1055 = vmatprep.subr.mxu0 0.0
    %1056 = vmatpush2.msra.mxu0 0.0
    %1057 = vmatprep.subr.mxu0 0.0
    %1058 = vmatpush2.msra.mxu0 0.0
    %1059 = vmatprep.mubr.f32.mxu0 0.0
    %1060 = vmatmul.mubr.f32.gmra.mxu0 %v993
    %v1061 = vpop.f32.mrf.mxu0
    %v1062 = vadd.f32 0.0, %v1061
    %v1063 = vpop.f32.mrf.mxu0
    %1064 = vdwg.mxu0
    %v1066 = vsel %vm700, %v742, 0
    %1068 = vmatprep.subr.mxu0 0.0
    %1069 = vmatpush1.msra.mxu0 0.0
    %1070 = vmatprep.subr.mxu0 0.0
    %1071 = vmatpush1.msra.mxu0 0.0
    %1072 = vmatprep.subr.mxu0 0.0
    %1073 = vmatpush1.msra.mxu0 0.0
    %1074 = vmatprep.subr.mxu0 0.0
    %1075 = vmatpush1.msra.mxu0 0.0
    %1076 = vmatprep.subr.mxu0 0.0
    %1077 = vmatpush1.msra.mxu0 0.0
    %1078 = vmatprep.subr.mxu0 0.0
    %1079 = vmatpush1.msra.mxu0 0.0
    %1080 = vmatprep.subr.mxu0 0.0
    %1081 = vmatpush1.msra.mxu0 0.0
    %1082 = vmatprep.subr.mxu0 0.0
    %1083 = vmatpush1.msra.mxu0 0.0
    %1084 = vmatprep.subr.mxu0 0.0
    %1085 = vmatpush1.msra.mxu0 0.0
    %1086 = vmatprep.subr.mxu0 0.0
    %1087 = vmatpush1.msra.mxu0 0.0
    %1088 = vmatprep.subr.mxu0 0.0
    %1089 = vmatpush1.msra.mxu0 0.0
    %1090 = vmatprep.subr.mxu0 0.0
    %1091 = vmatpush1.msra.mxu0 0.0
    %1092 = vmatprep.subr.mxu0 0.0
    %1093 = vmatpush1.msra.mxu0 0.0
    %1094 = vmatprep.subr.mxu0 0.0
    %1095 = vmatpush1.msra.mxu0 0.0
    %1096 = vmatprep.subr.mxu0 0.0
    %1097 = vmatpush1.msra.mxu0 0.0
    %1098 = vmatprep.subr.mxu0 0.0
    %1099 = vmatpush1.msra.mxu0 %v79
    %1100 = vmatprep.subr.mxu0 0.0
    %1101 = vmatpush2.msra.mxu0 0.0
    %1102 = vmatprep.subr.mxu0 0.0
    %1103 = vmatpush2.msra.mxu0 0.0
    %1104 = vmatprep.subr.mxu0 0.0
    %1105 = vmatpush2.msra.mxu0 0.0
    %1106 = vmatprep.subr.mxu0 0.0
    %1107 = vmatpush2.msra.mxu0 0.0
    %1108 = vmatprep.subr.mxu0 0.0
    %1109 = vmatpush2.msra.mxu0 0.0
    %1110 = vmatprep.subr.mxu0 0.0
    %1111 = vmatpush2.msra.mxu0 0.0
    %1112 = vmatprep.subr.mxu0 0.0
    %1113 = vmatpush2.msra.mxu0 0.0
    %1114 = vmatprep.subr.mxu0 0.0
    %1115 = vmatpush2.msra.mxu0 0.0
    %1116 = vmatprep.subr.mxu0 0.0
    %1117 = vmatpush2.msra.mxu0 0.0
    %1118 = vmatprep.subr.mxu0 0.0
    %1119 = vmatpush2.msra.mxu0 0.0
    %1120 = vmatprep.subr.mxu0 0.0
    %1121 = vmatpush2.msra.mxu0 0.0
    %1122 = vmatprep.subr.mxu0 0.0
    %1123 = vmatpush2.msra.mxu0 0.0
    %1124 = vmatprep.subr.mxu0 0.0
    %1125 = vmatpush2.msra.mxu0 0.0
    %1126 = vmatprep.subr.mxu0 0.0
    %1127 = vmatpush2.msra.mxu0 0.0
    %1128 = vmatprep.subr.mxu0 0.0
    %1129 = vmatpush2.msra.mxu0 0.0
    %1130 = vmatprep.subr.mxu0 0.0
    %1131 = vmatpush2.msra.mxu0 0.0
    %1132 = vmatprep.mubr.f32.mxu0 0.0
    %1133 = vmatmul.mubr.f32.gmra.mxu0 %v1066
    %v1134 = vpop.f32.mrf.mxu0
    %v1135 = vadd.f32 0.0, %v1134
    %v1136 = vpop.f32.mrf.mxu0
    %1137 = vdwg.mxu0
    %v1139 = vsel %vm700, %v744, 0
    %1141 = vmatprep.subr.mxu0 0.0
    %1142 = vmatpush1.msra.mxu0 0.0
    %1143 = vmatprep.subr.mxu0 0.0
    %1144 = vmatpush1.msra.mxu0 0.0
    %1145 = vmatprep.subr.mxu0 0.0
    %1146 = vmatpush1.msra.mxu0 0.0
    %1147 = vmatprep.subr.mxu0 0.0
    %1148 = vmatpush1.msra.mxu0 0.0
    %1149 = vmatprep.subr.mxu0 0.0
    %1150 = vmatpush1.msra.mxu0 0.0
    %1151 = vmatprep.subr.mxu0 0.0
    %1152 = vmatpush1.msra.mxu0 0.0
    %1153 = vmatprep.subr.mxu0 0.0
    %1154 = vmatpush1.msra.mxu0 0.0
    %1155 = vmatprep.subr.mxu0 0.0
    %1156 = vmatpush1.msra.mxu0 0.0
    %1157 = vmatprep.subr.mxu0 0.0
    %1158 = vmatpush1.msra.mxu0 0.0
    %1159 = vmatprep.subr.mxu0 0.0
    %1160 = vmatpush1.msra.mxu0 0.0
    %1161 = vmatprep.subr.mxu0 0.0
    %1162 = vmatpush1.msra.mxu0 0.0
    %1163 = vmatprep.subr.mxu0 0.0
    %1164 = vmatpush1.msra.mxu0 0.0
    %1165 = vmatprep.subr.mxu0 0.0
    %1166 = vmatpush1.msra.mxu0 0.0
    %1167 = vmatprep.subr.mxu0 0.0
    %1168 = vmatpush1.msra.mxu0 0.0
    %1169 = vmatprep.subr.mxu0 0.0
    %1170 = vmatpush1.msra.mxu0 0.0
    %1171 = vmatprep.subr.mxu0 0.0
    %1172 = vmatpush1.msra.mxu0 %v80
    %1173 = vmatprep.subr.mxu0 0.0
    %1174 = vmatpush2.msra.mxu0 0.0
    %1175 = vmatprep.subr.mxu0 0.0
    %1176 = vmatpush2.msra.mxu0 0.0
    %1177 = vmatprep.subr.mxu0 0.0
    %1178 = vmatpush2.msra.mxu0 0.0
    %1179 = vmatprep.subr.mxu0 0.0
    %1180 = vmatpush2.msra.mxu0 0.0
    %1181 = vmatprep.subr.mxu0 0.0
    %1182 = vmatpush2.msra.mxu0 0.0
    %1183 = vmatprep.subr.mxu0 0.0
    %1184 = vmatpush2.msra.mxu0 0.0
    %1185 = vmatprep.subr.mxu0 0.0
    %1186 = vmatpush2.msra.mxu0 0.0
    %1187 = vmatprep.subr.mxu0 0.0
    %1188 = vmatpush2.msra.mxu0 0.0
    %1189 = vmatprep.subr.mxu0 0.0
    %1190 = vmatpush2.msra.mxu0 0.0
    %1191 = vmatprep.subr.mxu0 0.0
    %1192 = vmatpush2.msra.mxu0 0.0
    %1193 = vmatprep.subr.mxu0 0.0
    %1194 = vmatpush2.msra.mxu0 0.0
    %1195 = vmatprep.subr.mxu0 0.0
    %1196 = vmatpush2.msra.mxu0 0.0
    %1197 = vmatprep.subr.mxu0 0.0
    %1198 = vmatpush2.msra.mxu0 0.0
    %1199 = vmatprep.subr.mxu0 0.0
    %1200 = vmatpush2.msra.mxu0 0.0
    %1201 = vmatprep.subr.mxu0 0.0
    %1202 = vmatpush2.msra.mxu0 0.0
    %1203 = vmatprep.subr.mxu0 0.0
    %1204 = vmatpush2.msra.mxu0 0.0
    %1205 = vmatprep.mubr.f32.mxu0 0.0
    %1206 = vmatmul.mubr.f32.gmra.mxu0 %v1139
    %v1207 = vpop.f32.mrf.mxu0
    %v1208 = vadd.f32 0.0, %v1207
    %v1209 = vpop.f32.mrf.mxu0
    %1210 = vdwg.mxu0
    %v1212 = vsel %vm700, %v746, 0
    %1214 = vmatprep.subr.mxu0 0.0
    %1215 = vmatpush1.msra.mxu0 0.0
    %1216 = vmatprep.subr.mxu0 0.0
    %1217 = vmatpush1.msra.mxu0 0.0
    %1218 = vmatprep.subr.mxu0 0.0
    %1219 = vmatpush1.msra.mxu0 0.0
    %1220 = vmatprep.subr.mxu0 0.0
    %1221 = vmatpush1.msra.mxu0 0.0
    %1222 = vmatprep.subr.mxu0 0.0
    %1223 = vmatpush1.msra.mxu0 0.0
    %1224 = vmatprep.subr.mxu0 0.0
    %1225 = vmatpush1.msra.mxu0 0.0
    %1226 = vmatprep.subr.mxu0 0.0
    %1227 = vmatpush1.msra.mxu0 0.0
    %1228 = vmatprep.subr.mxu0 0.0
    %1229 = vmatpush1.msra.mxu0 0.0
    %1230 = vmatprep.subr.mxu0 0.0
    %1231 = vmatpush1.msra.mxu0 0.0
    %1232 = vmatprep.subr.mxu0 0.0
    %1233 = vmatpush1.msra.mxu0 0.0
    %1234 = vmatprep.subr.mxu0 0.0
    %1235 = vmatpush1.msra.mxu0 0.0
    %1236 = vmatprep.subr.mxu0 0.0
    %1237 = vmatpush1.msra.mxu0 0.0
    %1238 = vmatprep.subr.mxu0 0.0
    %1239 = vmatpush1.msra.mxu0 0.0
    %1240 = vmatprep.subr.mxu0 0.0
    %1241 = vmatpush1.msra.mxu0 0.0
    %1242 = vmatprep.subr.mxu0 0.0
    %1243 = vmatpush1.msra.mxu0 0.0
    %1244 = vmatprep.subr.mxu0 0.0
    %1245 = vmatpush1.msra.mxu0 %v81
    %1246 = vmatprep.subr.mxu0 0.0
    %1247 = vmatpush2.msra.mxu0 0.0
    %1248 = vmatprep.subr.mxu0 0.0
    %1249 = vmatpush2.msra.mxu0 0.0
    %1250 = vmatprep.subr.mxu0 0.0
    %1251 = vmatpush2.msra.mxu0 0.0
    %1252 = vmatprep.subr.mxu0 0.0
    %1253 = vmatpush2.msra.mxu0 0.0
    %1254 = vmatprep.subr.mxu0 0.0
    %1255 = vmatpush2.msra.mxu0 0.0
    %1256 = vmatprep.subr.mxu0 0.0
    %1257 = vmatpush2.msra.mxu0 0.0
    %1258 = vmatprep.subr.mxu0 0.0
    %1259 = vmatpush2.msra.mxu0 0.0
    %1260 = vmatprep.subr.mxu0 0.0
    %1261 = vmatpush2.msra.mxu0 0.0
    %1262 = vmatprep.subr.mxu0 0.0
    %1263 = vmatpush2.msra.mxu0 0.0
    %1264 = vmatprep.subr.mxu0 0.0
    %1265 = vmatpush2.msra.mxu0 0.0
    %1266 = vmatprep.subr.mxu0 0.0
    %1267 = vmatpush2.msra.mxu0 0.0
    %1268 = vmatprep.subr.mxu0 0.0
    %1269 = vmatpush2.msra.mxu0 0.0
    %1270 = vmatprep.subr.mxu0 0.0
    %1271 = vmatpush2.msra.mxu0 0.0
    %1272 = vmatprep.subr.mxu0 0.0
    %1273 = vmatpush2.msra.mxu0 0.0
    %1274 = vmatprep.subr.mxu0 0.0
    %1275 = vmatpush2.msra.mxu0 0.0
    %1276 = vmatprep.subr.mxu0 0.0
    %1277 = vmatpush2.msra.mxu0 0.0
    %1278 = vmatprep.mubr.f32.mxu0 0.0
    %1279 = vmatmul.mubr.f32.gmra.mxu0 %v1212
    %v1280 = vpop.f32.mrf.mxu0
    %v1281 = vadd.f32 0.0, %v1280
    %v1282 = vpop.f32.mrf.mxu0
    %1283 = vdwg.mxu0
    %v1285 = vsel %vm700, %v748, 0
    %1287 = vmatprep.subr.mxu0 0.0
    %1288 = vmatpush1.msra.mxu0 0.0
    %1289 = vmatprep.subr.mxu0 0.0
    %1290 = vmatpush1.msra.mxu0 0.0
    %1291 = vmatprep.subr.mxu0 0.0
    %1292 = vmatpush1.msra.mxu0 0.0
    %1293 = vmatprep.subr.mxu0 0.0
    %1294 = vmatpush1.msra.mxu0 0.0
    %1295 = vmatprep.subr.mxu0 0.0
    %1296 = vmatpush1.msra.mxu0 0.0
    %1297 = vmatprep.subr.mxu0 0.0
    %1298 = vmatpush1.msra.mxu0 0.0
    %1299 = vmatprep.subr.mxu0 0.0
    %1300 = vmatpush1.msra.mxu0 0.0
    %1301 = vmatprep.subr.mxu0 0.0
    %1302 = vmatpush1.msra.mxu0 0.0
    %1303 = vmatprep.subr.mxu0 0.0
    %1304 = vmatpush1.msra.mxu0 0.0
    %1305 = vmatprep.subr.mxu0 0.0
    %1306 = vmatpush1.msra.mxu0 0.0
    %1307 = vmatprep.subr.mxu0 0.0
    %1308 = vmatpush1.msra.mxu0 0.0
    %1309 = vmatprep.subr.mxu0 0.0
    %1310 = vmatpush1.msra.mxu0 0.0
    %1311 = vmatprep.subr.mxu0 0.0
    %1312 = vmatpush1.msra.mxu0 0.0
    %1313 = vmatprep.subr.mxu0 0.0
    %1314 = vmatpush1.msra.mxu0 0.0
    %1315 = vmatprep.subr.mxu0 0.0
    %1316 = vmatpush1.msra.mxu0 0.0
    %1317 = vmatprep.subr.mxu0 0.0
    %1318 = vmatpush1.msra.mxu0 %v82
    %1319 = vmatprep.subr.mxu0 0.0
    %1320 = vmatpush2.msra.mxu0 0.0
    %1321 = vmatprep.subr.mxu0 0.0
    %1322 = vmatpush2.msra.mxu0 0.0
    %1323 = vmatprep.subr.mxu0 0.0
    %1324 = vmatpush2.msra.mxu0 0.0
    %1325 = vmatprep.subr.mxu0 0.0
    %1326 = vmatpush2.msra.mxu0 0.0
    %1327 = vmatprep.subr.mxu0 0.0
    %1328 = vmatpush2.msra.mxu0 0.0
    %1329 = vmatprep.subr.mxu0 0.0
    %1330 = vmatpush2.msra.mxu0 0.0
    %1331 = vmatprep.subr.mxu0 0.0
    %1332 = vmatpush2.msra.mxu0 0.0
    %1333 = vmatprep.subr.mxu0 0.0
    %1334 = vmatpush2.msra.mxu0 0.0
    %1335 = vmatprep.subr.mxu0 0.0
    %1336 = vmatpush2.msra.mxu0 0.0
    %1337 = vmatprep.subr.mxu0 0.0
    %1338 = vmatpush2.msra.mxu0 0.0
    %1339 = vmatprep.subr.mxu0 0.0
    %1340 = vmatpush2.msra.mxu0 0.0
    %1341 = vmatprep.subr.mxu0 0.0
    %1342 = vmatpush2.msra.mxu0 0.0
    %1343 = vmatprep.subr.mxu0 0.0
    %1344 = vmatpush2.msra.mxu0 0.0
    %1345 = vmatprep.subr.mxu0 0.0
    %1346 = vmatpush2.msra.mxu0 0.0
    %1347 = vmatprep.subr.mxu0 0.0
    %1348 = vmatpush2.msra.mxu0 0.0
    %1349 = vmatprep.subr.mxu0 0.0
    %1350 = vmatpush2.msra.mxu0 0.0
    %1351 = vmatprep.mubr.f32.mxu0 0.0
    %1352 = vmatmul.mubr.f32.gmra.mxu0 %v1285
    %v1353 = vpop.f32.mrf.mxu0
    %v1354 = vadd.f32 0.0, %v1353
    %v1355 = vpop.f32.mrf.mxu0
    %1356 = vdwg.mxu0
    %v1357 = vrcp.pop %v751
    %v1358 = vrcp.pop %v754
    %v1359 = vrcp.pop %v757
    %v1360 = vrcp.pop %v760
    %v1361 = vrcp.pop %v763
    %v1362 = vrcp.pop %v766
    %v1363 = vrcp.pop %v769
    %v1364 = vrcp.pop %v772
    %v1365 = vmul.f32 %v843, %v1357
    %v1366 = vmul.f32 %v916, %v1358
    %v1367 = vmul.f32 %v989, %v1359
    %v1368 = vmul.f32 %v1062, %v1360
    %v1369 = vmul.f32 %v1135, %v1361
    %v1370 = vmul.f32 %v1208, %v1362
    %v1371 = vmul.f32 %v1281, %v1363
    %v1372 = vmul.f32 %v1354, %v1364
    %1373 = vst.msk [vmem:[#allocation8] sm:$0xff] %vm91, %v1365
    %1374 = vst.msk [vmem:[#allocation8 + $0x8] sm:$0xff] %vm91, %v1366
    %1375 = vst.msk [vmem:[#allocation8 + $0x10] sm:$0xff] %vm91, %v1367
    %1376 = vst.msk [vmem:[#allocation8 + $0x18] sm:$0xff] %vm91, %v1368
    %1377 = vst.msk [vmem:[#allocation8 + $0x20] sm:$0xff] %vm91, %v1369
    %1378 = vst.msk [vmem:[#allocation8 + $0x28] sm:$0xff] %vm91, %v1370
    %1379 = vst.msk [vmem:[#allocation8 + $0x30] sm:$0xff] %vm91, %v1371
    %1380 = vst.msk [vmem:[#allocation8 + $0x38] sm:$0xff] %vm91, %v1372
    %v1381 = vrcp.pop %v751
    %v1382 = vrcp.pop %v754
    %v1383 = vrcp.pop %v757
    %v1384 = vrcp.pop %v760
    %v1385 = vrcp.pop %v763
    %v1386 = vrcp.pop %v766
    %v1387 = vrcp.pop %v769
    %v1388 = vrcp.pop %v772
    %v1389 = vmul.f32 %v734, %v1381
    %v1390 = vmul.f32 %v736, %v1382
    %v1391 = vmul.f32 %v738, %v1383
    %v1392 = vmul.f32 %v740, %v1384
    %v1393 = vmul.f32 %v742, %v1385
    %v1394 = vmul.f32 %v744, %v1386
    %v1395 = vmul.f32 %v746, %v1387
    %v1396 = vmul.f32 %v748, %v1388
    %1397 = vst.msk [vmem:[#allocation9] sm:$0xff] %vm700, %v1389
    %1398 = vst.msk [vmem:[#allocation9 + $0x8] sm:$0xff] %vm700, %v1390
    %1399 = vst.msk [vmem:[#allocation9 + $0x10] sm:$0xff] %vm700, %v1391
    %1400 = vst.msk [vmem:[#allocation9 + $0x18] sm:$0xff] %vm700, %v1392
    %1401 = vst.msk [vmem:[#allocation9 + $0x20] sm:$0xff] %vm700, %v1393
    %1402 = vst.msk [vmem:[#allocation9 + $0x28] sm:$0xff] %vm700, %v1394
    %1403 = vst.msk [vmem:[#allocation9 + $0x30] sm:$0xff] %vm700, %v1395
    %1404 = vst.msk [vmem:[#allocation9 + $0x38] sm:$0xff] %vm700, %v1396
    // Predicated region
    $region26: #{tpu_custom_call.1} parent=1 // pred_check
      _
    $region27: #{tpu_custom_call.1} parent=1 // pred_check_branch
      %1406 = sbr.rel (0) target = $region29
    $region28: #{tpu_custom_call.1} parent=1 // pred_region
      %s1408 = ssub.s32 1024, 1024
      %1409 = vsyncadd [#allocation4], %s1408
      %s1410 = sshll.u32 [#allocation8], 4
      %s1411 = int_to_ptr.vmem [resolvable:$true] %s1410
      %1416 = dma.vmem_to_hbm [thread:$0]  %s1411, 1024, %s3, [#allocation4], 128, 128, 8
    $region29: #{tpu_custom_call.1} parent=1 // pred_fallthru
      _
    // Predicated region
    $region30: #{tpu_custom_call.1} parent=1 // pred_check
      _
    $region31: #{tpu_custom_call.1} parent=1 // pred_check_branch
      %1418 = sbr.rel (0) target = $region33
    $region32: #{tpu_custom_call.1} parent=1 // pred_region
      %s1420 = ssub.s32 1024, 1024
      %1421 = vsyncadd [#allocation10], %s1420
      %s1422 = sshll.u32 [#allocation9], 4
      %s1423 = int_to_ptr.vmem [resolvable:$true] %s1422
      %1428 = dma.vmem_to_hbm [thread:$0]  %s1423, 1024, %s4, [#allocation10], 128, 128, 8
    $region33: #{tpu_custom_call.1} parent=1 // pred_fallthru
      _
    // Predicated region
    $region34: #{tpu_custom_call.1} parent=1 // pred_check
      _
    $region35: #{tpu_custom_call.1} parent=1 // pred_check_branch
      %1430 = sbr.rel (0) target = $region37
    $region36: #{tpu_custom_call.1} parent=1 // pred_region
      %1431 = dma.done [#allocation4], 1024
    $region37: #{tpu_custom_call.1} parent=1 // pred_fallthru
      _
    // Predicated region
    $region38: #{tpu_custom_call.1} parent=1 // pred_check
      _
    $region39: #{tpu_custom_call.1} parent=1 // pred_check_branch
      %1433 = sbr.rel (0) target = $region41
    $region40: #{tpu_custom_call.1} parent=1 // pred_region
      %1434 = dma.done [#allocation10], 1024
    $region41: #{tpu_custom_call.1} parent=1 // pred_fallthru
      _
    %1435 = vsyncpa [#allocation3], 1
    %1436 = vsyncpa [#allocation6], 1
    %1437 = vsyncpa [#allocation4], 1
    %1438 = vsyncpa [#allocation10], 1

</llo_original>
